<compile_context>
chip_gen: v7x
topology: tpu7x:2x2x1
jax: 0.10.0
libtpu: 0.0.40
codegen_flags: <defaults>
</compile_context>

<pallas_src>
import functools

import jax
import jax.numpy as jnp
from jax import lax
from jax.experimental import pallas as pl
from jax.experimental.pallas import tpu as pltpu


def _attend_and_write(dec, dec_score, enc, out_ref, attn_ref, *, h_dec, tin_valid, tin_pad):
    # energy[b, t, s] = sum_d dec_score[b, t, d] * enc[b, s, d]
    # Contract the last dims of both operands -> no transpose of enc, native dtypes to the MXU,
    # f32 accumulation via preferred_element_type.
    energy = jnp.einsum(
        "btd,bsd->bts", dec_score, enc, preferred_element_type=jnp.float32
    )
    if tin_valid != tin_pad:
        # Encoder was zero-padded along Tin for a lane-dense attn output; mask padded columns.
        col = lax.broadcasted_iota(jnp.int32, (1, 1, tin_pad), 2)
        energy = jnp.where(col < tin_valid, energy, -1e30)

    # Row-wise softmax over Tin (f32; reciprocal on the EUP so it co-issues with VPU/MXU work).
    m = jnp.max(energy, axis=-1, keepdims=True)
    e = jnp.exp(energy - m)
    denom = jnp.sum(e, axis=-1, keepdims=True)
    attn = e * pl.reciprocal(denom, approx=True)            # (Bt, Tt, Tin_pad), f32

    # context = attn @ enc  (contract Tin; feed attn in the encoder's native dtype to the MXU).
    ctx = jnp.einsum(
        "bts,bsd->btd", attn.astype(enc.dtype), enc, preferred_element_type=jnp.float32
    )

    attn_ref[...] = attn.astype(attn_ref.dtype)              # lane-dense (Tin_pad % 128 == 0)
    # Concat writes: full unmasked vst when h_dec % 128 == 0 (typical); still correct otherwise.
    out_ref[:, :, :h_dec] = dec.astype(out_ref.dtype)
    out_ref[:, :, h_dec:] = ctx.astype(out_ref.dtype)


def _luong_kernel_dot(dec_ref, enc_ref, out_ref, attn_ref, *, h_dec, tin_valid, tin_pad):
    dec = dec_ref[...]                                       # (Bt, Tt, H)
    enc = enc_ref[...]                                       # (Bt, Tin_pad, H)
    _attend_and_write(dec, dec, enc, out_ref, attn_ref,
                      h_dec=h_dec, tin_valid=tin_valid, tin_pad=tin_pad)


def _luong_kernel_general(dec_ref, enc_ref, w_ref, b_ref, out_ref, attn_ref,
                          *, h_dec, tin_valid, tin_pad):
    dec = dec_ref[...]                                       # (Bt, Tt, H_dec)
    enc = enc_ref[...]                                       # (Bt, Tin_pad, H_enc)
    # Weight pre-transposed host-side to (H_dec, H_enc): no in-kernel .T on the resident block.
    dproj = jnp.einsum(
        "btd,de->bte", dec, w_ref[...], preferred_element_type=jnp.float32
    ) + b_ref[...]
    _attend_and_write(dec, dproj.astype(enc.dtype), enc, out_ref, attn_ref,
                      h_dec=h_dec, tin_valid=tin_valid, tin_pad=tin_pad)


def _round_up(x, m):
    return ((x + m - 1) // m) * m


def luong_attention(decoder_outputs, encoder_outputs, *, score="dot",
                    weight=None, bias=None, block_b=None, block_tou=None):
    """Pallas implementation of LuongAttention.forward.

    decoder_outputs: [B, Tou, H_dec]
    encoder_outputs: [B, Tin, H_enc]
    weight/bias: nn.Linear(H_dec -> H_enc) parameters for score='general'
                 (weight shape (H_enc, H_dec), bias shape (H_enc,)).
    Returns (output [B, Tou, H_dec + H_enc], attn_weight [B, Tou, Tin]).
    """
    B, Tou, Hd = decoder_outputs.shape
    B2, Tin, He = encoder_outputs.shape
    assert B == B2
    dtype = decoder_outputs.dtype

    # Lane-dense attention output: pad Tin up to a multiple of 128 (zero-pad encoder; the kernel
    # masks the padded columns so the softmax/context are unaffected).
    tin_pad = _round_up(Tin, 128)
    enc = encoder_outputs
    if tin_pad != Tin:
        enc = jnp.pad(enc, ((0, 0), (0, tin_pad - Tin), (0, 0)))

    itemsize = jnp.dtype(dtype).itemsize
    if block_b is None:
        # Keep the (double-buffered) encoder tile under ~8 MiB so the whole working set fits
        # comfortably in VMEM even on v7x (64 MiB / TC).
        enc_bytes_per_batch = tin_pad * He * itemsize
        block_b = max(1, min(B, 8, (8 << 20) // max(1, enc_bytes_per_batch)))
    if block_tou is None:
        block_tou = Tou if Tou <= 256 else 256               # multiple of 8 (or full Tou)
    if block_tou != Tou and block_tou % 8 != 0:
        block_tou = _round_up(block_tou, 8)
    grid = (pl.cdiv(B, block_b), pl.cdiv(Tou, block_tou))

    dec_spec = pl.BlockSpec((block_b, block_tou, Hd), lambda b, t: (b, t, 0))
    # Same block index for all t -> Pallas skips the redundant encoder re-fetch across Tou steps.
    enc_spec = pl.BlockSpec((block_b, tin_pad, He), lambda b, t: (b, 0, 0))
    out_specs = (
        pl.BlockSpec((block_b, block_tou, Hd + He), lambda b, t: (b, t, 0)),
        pl.BlockSpec((block_b, block_tou, tin_pad), lambda b, t: (b, t, 0)),
    )
    out_shapes = (
        jax.ShapeDtypeStruct((B, Tou, Hd + He), dtype),
        jax.ShapeDtypeStruct((B, Tou, tin_pad), dtype),
    )
    cp = pltpu.CompilerParams(
        dimension_semantics=("parallel", "parallel"),
        vmem_limit_bytes=64 * 1024 * 1024,
    )

    if score == "dot":
        assert Hd == He
        kernel = functools.partial(_luong_kernel_dot, h_dec=Hd,
                                   tin_valid=Tin, tin_pad=tin_pad)
        out, attn = pl.pallas_call(
            kernel,
            grid=grid,
            in_specs=[dec_spec, enc_spec],
            out_specs=out_specs,
            out_shape=out_shapes,
            compiler_params=cp,
        )(decoder_outputs, enc)
    elif score == "general":
        assert weight is not None and bias is not None
        assert weight.shape == (He, Hd) and bias.shape == (He,)
        w_t = weight.T                                        # (Hd, He), host-side transpose
        bias2d = bias.reshape(1, He)
        kernel = functools.partial(_luong_kernel_general, h_dec=Hd,
                                   tin_valid=Tin, tin_pad=tin_pad)
        out, attn = pl.pallas_call(
            kernel,
            grid=grid,
            in_specs=[
                dec_spec,
                enc_spec,
                pl.BlockSpec((Hd, He), lambda b, t: (0, 0)),   # resident weight block
                pl.BlockSpec((1, He), lambda b, t: (0, 0)),    # resident bias block
            ],
            out_specs=out_specs,
            out_shape=out_shapes,
            compiler_params=cp,
        )(decoder_outputs, enc, w_t, bias2d)
    else:
        raise ValueError(f"unknown score {score!r}")

    if tin_pad != Tin:
        attn = attn[:, :, :Tin]
    return out, attn


def _reference(dec, enc, score, w=None, b=None):
    d = dec
    if score == "general":
        d = dec @ w.T + b
    energy = jnp.einsum("btd,bsd->bts", d, enc)
    attn = jax.nn.softmax(energy, axis=-1)
    ctx = jnp.einsum("bts,bsd->btd", attn, enc)
    out = jnp.concatenate([dec, ctx], axis=-1)
    return out, attn


if __name__ == "__main__":
    key = jax.random.PRNGKey(0)
    k_dec, k_enc, k_enc2, k_w, k_b = jax.random.split(key, 5)

    B, Tou, Tin, H = 2, 8, 16, 128   # encoder_hidden_size == decoder_hidden_size == H
    dec = jax.random.normal(k_dec, (B, Tou, H), dtype=jnp.float32)
    enc = jax.random.normal(k_enc, (B, Tin, H), dtype=jnp.float32)

    # Parameters for the score='general' variant (nn.Linear(H, H)).
    w = jax.random.normal(k_w, (H, H), dtype=jnp.float32) * 0.05
    b = jax.random.normal(k_b, (H,), dtype=jnp.float32) * 0.05

    # Approx reciprocal on the EUP -> ~1e-3 relative error on attn weights; tolerance loosened.
    TOL = dict(atol=5e-3, rtol=5e-3)

    # score='dot' (module default); Tin=16 exercises the lane-padded / masked-softmax path.
    out_dot, attn_dot = luong_attention(dec, enc, score="dot")
    jax.block_until_ready((out_dot, attn_dot))
    ref_out_dot, ref_attn_dot = _reference(dec, enc, "dot")
    assert out_dot.shape == (B, Tou, 2 * H) and attn_dot.shape == (B, Tou, Tin)
    assert jnp.allclose(out_dot, ref_out_dot, **TOL)
    assert jnp.allclose(attn_dot, ref_attn_dot, **TOL)

    # score='general'
    out_gen, attn_gen = luong_attention(dec, enc, score="general", weight=w, bias=b)
    jax.block_until_ready((out_gen, attn_gen))
    ref_out_gen, ref_attn_gen = _reference(dec, enc, "general", w, b)
    assert jnp.allclose(out_gen, ref_out_gen, **TOL)
    assert jnp.allclose(attn_gen, ref_attn_gen, **TOL)

    # score='dot' with Tin already lane-aligned (no padding / masking path).
    enc128 = jax.random.normal(k_enc2, (B, 128, H), dtype=jnp.float32)
    out_al, attn_al = luong_attention(dec, enc128, score="dot")
    jax.block_until_ready((out_al, attn_al))
    ref_out_al, ref_attn_al = _reference(dec, enc128, "dot")
    assert attn_al.shape == (B, Tou, 128)
    assert jnp.allclose(out_al, ref_out_al, **TOL)
    assert jnp.allclose(attn_al, ref_attn_al, **TOL)

    print("KERNEL_OK")
</pallas_src>

<mosaic_0001>
module attributes {stable_mosaic.version = 11 : i64} {
  func.func @_luong_kernel_dot(%arg0: i32, %arg1: i32, %arg2: memref<2x8x128xf32, #tpu.memory_space<vmem>>, %arg3: memref<2x128x128xf32, #tpu.memory_space<vmem>>, %arg4: memref<2x8x256xf32, #tpu.memory_space<vmem>>, %arg5: memref<2x8x128xf32, #tpu.memory_space<vmem>>) attributes {dimension_semantics = [#tpu.dimension_semantics<parallel>, #tpu.dimension_semantics<parallel>], iteration_bounds = array<i64: 1, 1>, scalar_prefetch = 0 : i64, scratch_operands = 0 : i64, tpu.core_type = #tpu.core_type<tc>, window_params = [{transform_indices = @transform_0, window_bounds = array<i64: 2, 8, 128>}, {transform_indices = @transform_1, window_bounds = array<i64: 2, 128, 128>}, {transform_indices = @transform_2, window_bounds = array<i64: 2, 8, 256>}, {transform_indices = @transform_3, window_bounds = array<i64: 2, 8, 128>}]} {
    %c0 = arith.constant 0 : index
    %c0_0 = arith.constant 0 : index
    %c0_1 = arith.constant 0 : index
    %0 = vector.load %arg2[%c0, %c0_0, %c0_1] : memref<2x8x128xf32, #tpu.memory_space<vmem>>, vector<2x8x128xf32>
    %c0_2 = arith.constant 0 : index
    %c0_3 = arith.constant 0 : index
    %c0_4 = arith.constant 0 : index
    %1 = vector.load %arg3[%c0_2, %c0_3, %c0_4] : memref<2x128x128xf32, #tpu.memory_space<vmem>>, vector<2x128x128xf32>
    "tpu.trace_start"() <{level = 10 : i32, message = "btd,bsd->bts"}> : () -> ()
    %cst = arith.constant dense<0.000000e+00> : vector<2x8x128xf32>
    %2 = tpu.matmul %0, %1, %cst {dimension_numbers = #tpu.dot_dimension_numbers<[2], [2], [1], [1], [0, 0, 0, 1, 1, 1], [0], [0]>} : vector<2x8x128xf32>, vector<2x128x128xf32>, vector<2x8x128xf32> -> vector<2x8x128xf32>
    "tpu.trace_stop"() : () -> ()
    %3 = tpu.iota {dimensions = array<i32: 2>} : vector<1x1x128xi32>
    %c16_i32 = arith.constant 16 : i32
    %4 = vector.broadcast %c16_i32 : i32 to vector<1x1x128xi32>
    %5 = arith.cmpi slt, %3, %4 : vector<1x1x128xi32>
    %cst_5 = arith.constant -1.000000e+30 : f32
    %6 = vector.shape_cast %5 : vector<1x1x128xi1> to vector<1x1x128xi1>
    %7 = vector.broadcast %6 : vector<1x1x128xi1> to vector<2x8x128xi1>
    %8 = vector.broadcast %cst_5 : f32 to vector<2x8x128xf32>
    %9 = arith.select %7, %2, %8 : vector<2x8x128xi1>, vector<2x8x128xf32>
    %cst_6 = arith.constant dense<0xFF800000> : vector<2x8xf32>
    %10 = vector.multi_reduction <maximumf>, %9, %cst_6 [2] : vector<2x8x128xf32> to vector<2x8xf32>
    %11 = vector.shape_cast %10 : vector<2x8xf32> to vector<2x8x1xf32>
    %12 = vector.broadcast %11 : vector<2x8x1xf32> to vector<2x8x128xf32>
    %13 = arith.subf %9, %12 : vector<2x8x128xf32>
    %14 = math.exp %13 : vector<2x8x128xf32>
    %cst_7 = arith.constant dense<0.000000e+00> : vector<2x8xf32>
    %15 = vector.multi_reduction <add>, %14, %cst_7 [2] : vector<2x8x128xf32> to vector<2x8xf32>
    %16 = vector.shape_cast %15 : vector<2x8xf32> to vector<2x8x1xf32>
    %17 = tpu.reciprocal %16 {approx = true} : vector<2x8x1xf32> -> vector<2x8x1xf32>
    %18 = vector.broadcast %17 : vector<2x8x1xf32> to vector<2x8x128xf32>
    %19 = arith.mulf %14, %18 : vector<2x8x128xf32>
    "tpu.trace_start"() <{level = 10 : i32, message = "bts,bsd->btd"}> : () -> ()
    %cst_8 = arith.constant dense<0.000000e+00> : vector<2x8x128xf32>
    %20 = tpu.matmul %19, %1, %cst_8 {dimension_numbers = #tpu.dot_dimension_numbers<[2], [1], [1], [2], [0, 0, 0, 1, 1, 2], [0], [0]>} : vector<2x8x128xf32>, vector<2x128x128xf32>, vector<2x8x128xf32> -> vector<2x8x128xf32>
    "tpu.trace_stop"() : () -> ()
    %c0_9 = arith.constant 0 : index
    %c0_10 = arith.constant 0 : index
    %c0_11 = arith.constant 0 : index
    %21 = vector.load %arg5[%c0_9, %c0_10, %c0_11] : memref<2x8x128xf32, #tpu.memory_space<vmem>>, vector<2x8x128xf32>
    tpu.vector_store %arg5[%c0_9, %c0_10, %c0_11], %19 {strides = array<i32>} : memref<2x8x128xf32, #tpu.memory_space<vmem>>, vector<2x8x128xf32>,
    %c0_12 = arith.constant 0 : index
    %c0_13 = arith.constant 0 : index
    %c0_14 = arith.constant 0 : index
    %22 = vector.load %arg4[%c0_12, %c0_13, %c0_14] : memref<2x8x256xf32, #tpu.memory_space<vmem>>, vector<2x8x128xf32>
    tpu.vector_store %arg4[%c0_12, %c0_13, %c0_14], %0 {strides = array<i32>} : memref<2x8x256xf32, #tpu.memory_space<vmem>>, vector<2x8x128xf32>,
    %c0_15 = arith.constant 0 : index
    %c0_16 = arith.constant 0 : index
    %c128 = arith.constant 128 : index
    %23 = vector.load %arg4[%c0_15, %c0_16, %c128] : memref<2x8x256xf32, #tpu.memory_space<vmem>>, vector<2x8x128xf32>
    tpu.vector_store %arg4[%c0_15, %c0_16, %c128], %20 {strides = array<i32>} : memref<2x8x256xf32, #tpu.memory_space<vmem>>, vector<2x8x128xf32>,
    return
  }
  func.func @transform_0(%arg0: i32, %arg1: i32) -> (i32, i32, i32) {
    %c0_i32 = arith.constant 0 : i32
    %c0_i32_0 = arith.constant 0 : i32
    return %arg0, %arg1, %c0_i32 : i32, i32, i32
  }
  func.func @transform_1(%arg0: i32, %arg1: i32) -> (i32, i32, i32) {
    %c0_i32 = arith.constant 0 : i32
    %c0_i32_0 = arith.constant 0 : i32
    %c0_i32_1 = arith.constant 0 : i32
    return %arg0, %c0_i32, %c0_i32_0 : i32, i32, i32
  }
  func.func @transform_2(%arg0: i32, %arg1: i32) -> (i32, i32, i32) {
    %c0_i32 = arith.constant 0 : i32
    %c0_i32_0 = arith.constant 0 : i32
    return %arg0, %arg1, %c0_i32 : i32, i32, i32
  }
  func.func @transform_3(%arg0: i32, %arg1: i32) -> (i32, i32, i32) {
    %c0_i32 = arith.constant 0 : i32
    %c0_i32_0 = arith.constant 0 : i32
    return %arg0, %arg1, %c0_i32 : i32, i32, i32
  }
}

</mosaic_0001>

<llo_original>
// kernel: tpu_custom_call.1
$region0: #{tpu_custom_call.1}
  #allocation0 [shape = 'u32[]', space=smem, size = 0x4, offset = 0x4, fixed_abs, tag = 'smem constant byte address 0x4 - core index']
  #allocation1 [shape = 'u32[144,128]{1,0:T(1,128)}', space=vmem, size = 0x12000, scoped, tag = 'internal scratch']
  %s0 = inlined_call_operand.hbm [shape: f32[2,8,128], index: 0, kind: input, shape index: {}]
  %s1 = inlined_call_operand.hbm [shape: f32[2,128,128], index: 1, kind: input, shape index: {}]
  %s2 = inlined_call_operand.hbm [shape: f32[2,8,256], index: 2, kind: output, shape index: {0}]
  %s3 = inlined_call_operand.hbm [shape: f32[2,8,128], index: 3, kind: output, shape index: {1}]
  %4 = xla_tuple %s2, %s3
  %s5 = sld [smem:[#allocation0]]
  $region34: #{tpu_custom_call.1} parent=0
    _
  %s7 = ssub.s32 1, %s5
  %s8 = scalar_select 0, %s7, %s5
  $region1: #{tpu_custom_call.1} parent=0
    #allocation2 [shape = 'u8[8192]{0}', space=vmem, size = 0x2000, scoped, tag = 'input window, operand 0, single buffered']
    #allocation3 [shape = 's32[1]{0}', space=sflag, size = 0x4, scoped, tag = 'scoped memory for tpu_custom_call.1']
    #allocation4 [shape = 's32[1]{0}', space=sflag, size = 0x4, scoped, tag = 'scoped memory for tpu_custom_call.1']
    #allocation5 [shape = 'u8[131072]{0}', space=vmem, size = 0x20000, scoped, tag = 'input window, operand 1, single buffered']
    #allocation6 [shape = 's32[1]{0}', space=sflag, size = 0x4, scoped, tag = 'scoped memory for tpu_custom_call.1']
    #allocation7 [shape = 'u8[16384]{0}', space=vmem, size = 0x4000, scoped, tag = 'output window, operand 0, single buffered']
    #allocation8 [shape = 'u8[8192]{0}', space=vmem, size = 0x2000, scoped, tag = 'output window, operand 1, single buffered']
    #allocation9 [shape = 's32[1]{0}', space=sflag, size = 0x4, scoped, tag = 'scoped memory for tpu_custom_call.1']
    %9 = vsyncpa [#allocation3], 0
    %10 = vsyncpa [#allocation6], 0
    %11 = vsyncpa [#allocation4], 0
    %12 = vsyncpa [#allocation9], 0
    // Predicated region
    $region2: #{tpu_custom_call.1} parent=1 // pred_check
      _
    $region3: #{tpu_custom_call.1} parent=1 // pred_check_branch
      %14 = sbr.rel (0) target = $region5
    $region4: #{tpu_custom_call.1} parent=1 // pred_region
      %s16 = ssub.s32 256, 256
      %17 = vsyncadd [#allocation3], %s16
      %s18 = sshll.u32 [#allocation2], 4
      %s19 = int_to_ptr.vmem [resolvable:$true] %s18
      %24 = dma.hbm_to_vmem [thread:$0]  %s0, 256, %s19, [#allocation3], 128, 128, 8
    $region5: #{tpu_custom_call.1} parent=1 // pred_fallthru
      _
    // Predicated region
    $region6: #{tpu_custom_call.1} parent=1 // pred_check
      _
    $region7: #{tpu_custom_call.1} parent=1 // pred_check_branch
      %26 = sbr.rel (0) target = $region9
    $region8: #{tpu_custom_call.1} parent=1 // pred_region
      %s28 = ssub.s32 4096, 4096
      %29 = vsyncadd [#allocation6], %s28
      %s30 = sshll.u32 [#allocation5], 4
      %s31 = int_to_ptr.vmem [resolvable:$true] %s30
      %36 = dma.hbm_to_vmem [thread:$0]  %s1, 4096, %s31, [#allocation6], 128, 128, 8
    $region9: #{tpu_custom_call.1} parent=1 // pred_fallthru
      _
    // Predicated region
    $region10: #{tpu_custom_call.1} parent=1 // pred_check
      _
    $region11: #{tpu_custom_call.1} parent=1 // pred_check_branch
      %38 = sbr.rel (0) target = $region13
    $region12: #{tpu_custom_call.1} parent=1 // pred_region
      %39 = dma.done [#allocation3], 256
    $region13: #{tpu_custom_call.1} parent=1 // pred_fallthru
      _
    // Predicated region
    $region14: #{tpu_custom_call.1} parent=1 // pred_check
      _
    $region15: #{tpu_custom_call.1} parent=1 // pred_check_branch
      %41 = sbr.rel (0) target = $region17
    $region16: #{tpu_custom_call.1} parent=1 // pred_region
      %42 = dma.done [#allocation6], 4096
    $region17: #{tpu_custom_call.1} parent=1 // pred_fallthru
      _
    %v43 = vld [vmem:[#allocation2] sm:$0xff]
    %v44 = vld [vmem:[#allocation2 + $0x8] sm:$0xff]
    %v45 = vld [vmem:[#allocation5] sm:$0xff]
    %v46 = vld [vmem:[#allocation5 + $0x8] sm:$0xff]
    %v47 = vld [vmem:[#allocation5 + $0x10] sm:$0xff]
    %v48 = vld [vmem:[#allocation5 + $0x18] sm:$0xff]
    %v49 = vld [vmem:[#allocation5 + $0x20] sm:$0xff]
    %v50 = vld [vmem:[#allocation5 + $0x28] sm:$0xff]
    %v51 = vld [vmem:[#allocation5 + $0x30] sm:$0xff]
    %v52 = vld [vmem:[#allocation5 + $0x38] sm:$0xff]
    %v53 = vld [vmem:[#allocation5 + $0x40] sm:$0xff]
    %v54 = vld [vmem:[#allocation5 + $0x48] sm:$0xff]
    %v55 = vld [vmem:[#allocation5 + $0x50] sm:$0xff]
    %v56 = vld [vmem:[#allocation5 + $0x58] sm:$0xff]
    %v57 = vld [vmem:[#allocation5 + $0x60] sm:$0xff]
    %v58 = vld [vmem:[#allocation5 + $0x68] sm:$0xff]
    %v59 = vld [vmem:[#allocation5 + $0x70] sm:$0xff]
    %v60 = vld [vmem:[#allocation5 + $0x78] sm:$0xff]
    %v61 = vld [vmem:[#allocation5 + $0x80] sm:$0xff]
    %v62 = vld [vmem:[#allocation5 + $0x88] sm:$0xff]
    %v63 = vld [vmem:[#allocation5 + $0x90] sm:$0xff]
    %v64 = vld [vmem:[#allocation5 + $0x98] sm:$0xff]
    %v65 = vld [vmem:[#allocation5 + $0xa0] sm:$0xff]
    %v66 = vld [vmem:[#allocation5 + $0xa8] sm:$0xff]
    %v67 = vld [vmem:[#allocation5 + $0xb0] sm:$0xff]
    %v68 = vld [vmem:[#allocation5 + $0xb8] sm:$0xff]
    %v69 = vld [vmem:[#allocation5 + $0xc0] sm:$0xff]
    %v70 = vld [vmem:[#allocation5 + $0xc8] sm:$0xff]
    %v71 = vld [vmem:[#allocation5 + $0xd0] sm:$0xff]
    %v72 = vld [vmem:[#allocation5 + $0xd8] sm:$0xff]
    %v73 = vld [vmem:[#allocation5 + $0xe0] sm:$0xff]
    %v74 = vld [vmem:[#allocation5 + $0xe8] sm:$0xff]
    %v75 = vld [vmem:[#allocation5 + $0xf0] sm:$0xff]
    %v76 = vld [vmem:[#allocation5 + $0xf8] sm:$0xff]
    %77 = vmatprep.subr.mxu0 0.0
    %78 = vmatpush1.xpose.msra.mxu0 %v45
    %79 = vmatprep.subr.mxu0 0.0
    %80 = vmatpush1.xpose.msra.mxu0 %v46
    %81 = vmatprep.subr.mxu0 0.0
    %82 = vmatpush1.xpose.msra.mxu0 %v47
    %83 = vmatprep.subr.mxu0 0.0
    %84 = vmatpush1.xpose.msra.mxu0 %v48
    %85 = vmatprep.subr.mxu0 0.0
    %86 = vmatpush1.xpose.msra.mxu0 %v49
    %87 = vmatprep.subr.mxu0 0.0
    %88 = vmatpush1.xpose.msra.mxu0 %v50
    %89 = vmatprep.subr.mxu0 0.0
    %90 = vmatpush1.xpose.msra.mxu0 %v51
    %91 = vmatprep.subr.mxu0 0.0
    %92 = vmatpush1.xpose.msra.mxu0 %v52
    %93 = vmatprep.subr.mxu0 0.0
    %94 = vmatpush1.xpose.msra.mxu0 %v53
    %95 = vmatprep.subr.mxu0 0.0
    %96 = vmatpush1.xpose.msra.mxu0 %v54
    %97 = vmatprep.subr.mxu0 0.0
    %98 = vmatpush1.xpose.msra.mxu0 %v55
    %99 = vmatprep.subr.mxu0 0.0
    %100 = vmatpush1.xpose.msra.mxu0 %v56
    %101 = vmatprep.subr.mxu0 0.0
    %102 = vmatpush1.xpose.msra.mxu0 %v57
    %103 = vmatprep.subr.mxu0 0.0
    %104 = vmatpush1.xpose.msra.mxu0 %v58
    %105 = vmatprep.subr.mxu0 0.0
    %106 = vmatpush1.xpose.msra.mxu0 %v59
    %107 = vmatprep.subr.mxu0 0.0
    %108 = vmatpush1.xpose.msra.mxu0 %v60
    %109 = vmatprep.subr.mxu0 0.0
    %110 = vmatpush1.xpose.msra.mxu0 0.0
    %111 = vmatprep.subr.mxu0 0.0
    %112 = vmatpush1.xpose.msra.mxu0 0.0
    %113 = vmatprep.subr.mxu0 0.0
    %114 = vmatpush1.xpose.msra.mxu0 0.0
    %115 = vmatprep.subr.mxu0 0.0
    %116 = vmatpush1.xpose.msra.mxu0 0.0
    %117 = vmatprep.subr.mxu0 0.0
    %118 = vmatpush1.xpose.msra.mxu0 0.0
    %119 = vmatprep.subr.mxu0 0.0
    %120 = vmatpush1.xpose.msra.mxu0 0.0
    %121 = vmatprep.subr.mxu0 0.0
    %122 = vmatpush1.xpose.msra.mxu0 0.0
    %123 = vmatprep.subr.mxu0 0.0
    %124 = vmatpush1.xpose.msra.mxu0 0.0
    %125 = vmatprep.subr.mxu0 0.0
    %126 = vmatpush1.xpose.msra.mxu0 0.0
    %127 = vmatprep.subr.mxu0 0.0
    %128 = vmatpush1.xpose.msra.mxu0 0.0
    %129 = vmatprep.subr.mxu0 0.0
    %130 = vmatpush1.xpose.msra.mxu0 0.0
    %131 = vmatprep.subr.mxu0 0.0
    %132 = vmatpush1.xpose.msra.mxu0 0.0
    %133 = vmatprep.subr.mxu0 0.0
    %134 = vmatpush1.xpose.msra.mxu0 0.0
    %135 = vmatprep.subr.mxu0 0.0
    %136 = vmatpush1.xpose.msra.mxu0 0.0
    %137 = vmatprep.subr.mxu0 0.0
    %138 = vmatpush1.xpose.msra.mxu0 0.0
    %139 = vmatprep.subr.mxu0 0.0
    %140 = vmatpush1.xpose.msra.mxu0 0.0
    %141 = vmatprep.mubr.f32.mxu0 0.0
    %142 = vmatmul.mubr.f32.gmra.mrb[0].mxu0 %v43
    %v143 = vpop.f32.mrb[0].mxu0
    %v144 = vadd.f32 0.0, %v143
    %v145 = vpop.f32.mrb[0].mxu0
    %146 = vdwg.mxu0
    %147 = vmatprep.subr.mxu0 0.0
    %148 = vmatpush1.xpose.msra.mxu0 %v61
    %149 = vmatprep.subr.mxu0 0.0
    %150 = vmatpush1.xpose.msra.mxu0 %v62
    %151 = vmatprep.subr.mxu0 0.0
    %152 = vmatpush1.xpose.msra.mxu0 %v63
    %153 = vmatprep.subr.mxu0 0.0
    %154 = vmatpush1.xpose.msra.mxu0 %v64
    %155 = vmatprep.subr.mxu0 0.0
    %156 = vmatpush1.xpose.msra.mxu0 %v65
    %157 = vmatprep.subr.mxu0 0.0
    %158 = vmatpush1.xpose.msra.mxu0 %v66
    %159 = vmatprep.subr.mxu0 0.0
    %160 = vmatpush1.xpose.msra.mxu0 %v67
    %161 = vmatprep.subr.mxu0 0.0
    %162 = vmatpush1.xpose.msra.mxu0 %v68
    %163 = vmatprep.subr.mxu0 0.0
    %164 = vmatpush1.xpose.msra.mxu0 %v69
    %165 = vmatprep.subr.mxu0 0.0
    %166 = vmatpush1.xpose.msra.mxu0 %v70
    %167 = vmatprep.subr.mxu0 0.0
    %168 = vmatpush1.xpose.msra.mxu0 %v71
    %169 = vmatprep.subr.mxu0 0.0
    %170 = vmatpush1.xpose.msra.mxu0 %v72
    %171 = vmatprep.subr.mxu0 0.0
    %172 = vmatpush1.xpose.msra.mxu0 %v73
    %173 = vmatprep.subr.mxu0 0.0
    %174 = vmatpush1.xpose.msra.mxu0 %v74
    %175 = vmatprep.subr.mxu0 0.0
    %176 = vmatpush1.xpose.msra.mxu0 %v75
    %177 = vmatprep.subr.mxu0 0.0
    %178 = vmatpush1.xpose.msra.mxu0 %v76
    %179 = vmatprep.subr.mxu0 0.0
    %180 = vmatpush1.xpose.msra.mxu0 0.0
    %181 = vmatprep.subr.mxu0 0.0
    %182 = vmatpush1.xpose.msra.mxu0 0.0
    %183 = vmatprep.subr.mxu0 0.0
    %184 = vmatpush1.xpose.msra.mxu0 0.0
    %185 = vmatprep.subr.mxu0 0.0
    %186 = vmatpush1.xpose.msra.mxu0 0.0
    %187 = vmatprep.subr.mxu0 0.0
    %188 = vmatpush1.xpose.msra.mxu0 0.0
    %189 = vmatprep.subr.mxu0 0.0
    %190 = vmatpush1.xpose.msra.mxu0 0.0
    %191 = vmatprep.subr.mxu0 0.0
    %192 = vmatpush1.xpose.msra.mxu0 0.0
    %193 = vmatprep.subr.mxu0 0.0
    %194 = vmatpush1.xpose.msra.mxu0 0.0
    %195 = vmatprep.subr.mxu0 0.0
    %196 = vmatpush1.xpose.msra.mxu0 0.0
    %197 = vmatprep.subr.mxu0 0.0
    %198 = vmatpush1.xpose.msra.mxu0 0.0
    %199 = vmatprep.subr.mxu0 0.0
    %200 = vmatpush1.xpose.msra.mxu0 0.0
    %201 = vmatprep.subr.mxu0 0.0
    %202 = vmatpush1.xpose.msra.mxu0 0.0
    %203 = vmatprep.subr.mxu0 0.0
    %204 = vmatpush1.xpose.msra.mxu0 0.0
    %205 = vmatprep.subr.mxu0 0.0
    %206 = vmatpush1.xpose.msra.mxu0 0.0
    %207 = vmatprep.subr.mxu0 0.0
    %208 = vmatpush1.xpose.msra.mxu0 0.0
    %209 = vmatprep.subr.mxu0 0.0
    %210 = vmatpush1.xpose.msra.mxu0 0.0
    %211 = vmatprep.mubr.f32.mxu0 0.0
    %212 = vmatmul.mubr.f32.gmra.mrb[0].mxu0 %v44
    %v213 = vpop.f32.mrb[0].mxu0
    %v214 = vadd.f32 0.0, %v213
    %v215 = vpop.f32.mrb[0].mxu0
    %216 = vdwg.mxu0
    %v217 = vlaneseq
    %v218 = vand.u32 %v217, 127
    %vm219 = vcmp.lt.s32.totalorder %v218, 16
    %v220 = vsel %vm219, 1, 0
    %vm221 = vcmp.eq.s32.totalorder %v220, 1
    %v222 = vsel %vm221, %v144, -1e+30
    %v223 = vsel %vm221, %v214, -1e+30
    %224 = vmax.xlane.f32.xlu0 %v222
    %v225 = vpop.xlane.xlu0 %224
    %226 = vmax.xlane.f32.xlu0 %v223
    %v227 = vpop.xlane.xlu0 %226
    %v228 = vsub.f32 %v222, %v225
    %v229 = vsub.f32 %v223, %v227
    %v230 = vmul.f32 %v228, 1.442695
    %v231 = vpow.pop %v230
    %v232 = vmul.f32 %v229, 1.442695
    %v233 = vpow.pop %v232
    %234 = vadd.xlane.f32.xlu0 %v231
    %v235 = vpop.xlane.xlu0 %234
    %236 = vadd.xlane.f32.xlu0 %v233
    %v237 = vpop.xlane.xlu0 %236
    %v238 = vrcp.pop %v235
    %v239 = vrcp.pop %v237
    %v240 = vmul.f32 %v231, %v238
    %v241 = vmul.f32 %v233, %v239
    %242 = vmatprep.subr.mxu0 0.0
    %243 = vmatpush1.msra.mxu0 %v45
    %244 = vmatprep.subr.mxu0 0.0
    %245 = vmatpush1.msra.mxu0 %v46
    %246 = vmatprep.subr.mxu0 0.0
    %247 = vmatpush1.msra.mxu0 %v47
    %248 = vmatprep.subr.mxu0 0.0
    %249 = vmatpush1.msra.mxu0 %v48
    %250 = vmatprep.subr.mxu0 0.0
    %251 = vmatpush1.msra.mxu0 %v49
    %252 = vmatprep.subr.mxu0 0.0
    %253 = vmatpush1.msra.mxu0 %v50
    %254 = vmatprep.subr.mxu0 0.0
    %255 = vmatpush1.msra.mxu0 %v51
    %256 = vmatprep.subr.mxu0 0.0
    %257 = vmatpush1.msra.mxu0 %v52
    %258 = vmatprep.subr.mxu0 0.0
    %259 = vmatpush1.msra.mxu0 %v53
    %260 = vmatprep.subr.mxu0 0.0
    %261 = vmatpush1.msra.mxu0 %v54
    %262 = vmatprep.subr.mxu0 0.0
    %263 = vmatpush1.msra.mxu0 %v55
    %264 = vmatprep.subr.mxu0 0.0
    %265 = vmatpush1.msra.mxu0 %v56
    %266 = vmatprep.subr.mxu0 0.0
    %267 = vmatpush1.msra.mxu0 %v57
    %268 = vmatprep.subr.mxu0 0.0
    %269 = vmatpush1.msra.mxu0 %v58
    %270 = vmatprep.subr.mxu0 0.0
    %271 = vmatpush1.msra.mxu0 %v59
    %272 = vmatprep.subr.mxu0 0.0
    %273 = vmatpush1.msra.mxu0 %v60
    %274 = vmatprep.subr.mxu0 0.0
    %275 = vmatpush1.msra.mxu0 0.0
    %276 = vmatprep.subr.mxu0 0.0
    %277 = vmatpush1.msra.mxu0 0.0
    %278 = vmatprep.subr.mxu0 0.0
    %279 = vmatpush1.msra.mxu0 0.0
    %280 = vmatprep.subr.mxu0 0.0
    %281 = vmatpush1.msra.mxu0 0.0
    %282 = vmatprep.subr.mxu0 0.0
    %283 = vmatpush1.msra.mxu0 0.0
    %284 = vmatprep.subr.mxu0 0.0
    %285 = vmatpush1.msra.mxu0 0.0
    %286 = vmatprep.subr.mxu0 0.0
    %287 = vmatpush1.msra.mxu0 0.0
    %288 = vmatprep.subr.mxu0 0.0
    %289 = vmatpush1.msra.mxu0 0.0
    %290 = vmatprep.subr.mxu0 0.0
    %291 = vmatpush1.msra.mxu0 0.0
    %292 = vmatprep.subr.mxu0 0.0
    %293 = vmatpush1.msra.mxu0 0.0
    %294 = vmatprep.subr.mxu0 0.0
    %295 = vmatpush1.msra.mxu0 0.0
    %296 = vmatprep.subr.mxu0 0.0
    %297 = vmatpush1.msra.mxu0 0.0
    %298 = vmatprep.subr.mxu0 0.0
    %299 = vmatpush1.msra.mxu0 0.0
    %300 = vmatprep.subr.mxu0 0.0
    %301 = vmatpush1.msra.mxu0 0.0
    %302 = vmatprep.subr.mxu0 0.0
    %303 = vmatpush1.msra.mxu0 0.0
    %304 = vmatprep.subr.mxu0 0.0
    %305 = vmatpush1.msra.mxu0 0.0
    %306 = vmatprep.mubr.f32.mxu0 0.0
    %307 = vmatmul.mubr.f32.gmra.mrb[0].mxu0 %v240
    %v308 = vpop.f32.mrb[0].mxu0
    %v309 = vadd.f32 0.0, %v308
    %v310 = vpop.f32.mrb[0].mxu0
    %311 = vdwg.mxu0
    %312 = vmatprep.subr.mxu0 0.0
    %313 = vmatpush1.msra.mxu0 %v61
    %314 = vmatprep.subr.mxu0 0.0
    %315 = vmatpush1.msra.mxu0 %v62
    %316 = vmatprep.subr.mxu0 0.0
    %317 = vmatpush1.msra.mxu0 %v63
    %318 = vmatprep.subr.mxu0 0.0
    %319 = vmatpush1.msra.mxu0 %v64
    %320 = vmatprep.subr.mxu0 0.0
    %321 = vmatpush1.msra.mxu0 %v65
    %322 = vmatprep.subr.mxu0 0.0
    %323 = vmatpush1.msra.mxu0 %v66
    %324 = vmatprep.subr.mxu0 0.0
    %325 = vmatpush1.msra.mxu0 %v67
    %326 = vmatprep.subr.mxu0 0.0
    %327 = vmatpush1.msra.mxu0 %v68
    %328 = vmatprep.subr.mxu0 0.0
    %329 = vmatpush1.msra.mxu0 %v69
    %330 = vmatprep.subr.mxu0 0.0
    %331 = vmatpush1.msra.mxu0 %v70
    %332 = vmatprep.subr.mxu0 0.0
    %333 = vmatpush1.msra.mxu0 %v71
    %334 = vmatprep.subr.mxu0 0.0
    %335 = vmatpush1.msra.mxu0 %v72
    %336 = vmatprep.subr.mxu0 0.0
    %337 = vmatpush1.msra.mxu0 %v73
    %338 = vmatprep.subr.mxu0 0.0
    %339 = vmatpush1.msra.mxu0 %v74
    %340 = vmatprep.subr.mxu0 0.0
    %341 = vmatpush1.msra.mxu0 %v75
    %342 = vmatprep.subr.mxu0 0.0
    %343 = vmatpush1.msra.mxu0 %v76
    %344 = vmatprep.subr.mxu0 0.0
    %345 = vmatpush1.msra.mxu0 0.0
    %346 = vmatprep.subr.mxu0 0.0
    %347 = vmatpush1.msra.mxu0 0.0
    %348 = vmatprep.subr.mxu0 0.0
    %349 = vmatpush1.msra.mxu0 0.0
    %350 = vmatprep.subr.mxu0 0.0
    %351 = vmatpush1.msra.mxu0 0.0
    %352 = vmatprep.subr.mxu0 0.0
    %353 = vmatpush1.msra.mxu0 0.0
    %354 = vmatprep.subr.mxu0 0.0
    %355 = vmatpush1.msra.mxu0 0.0
    %356 = vmatprep.subr.mxu0 0.0
    %357 = vmatpush1.msra.mxu0 0.0
    %358 = vmatprep.subr.mxu0 0.0
    %359 = vmatpush1.msra.mxu0 0.0
    %360 = vmatprep.subr.mxu0 0.0
    %361 = vmatpush1.msra.mxu0 0.0
    %362 = vmatprep.subr.mxu0 0.0
    %363 = vmatpush1.msra.mxu0 0.0
    %364 = vmatprep.subr.mxu0 0.0
    %365 = vmatpush1.msra.mxu0 0.0
    %366 = vmatprep.subr.mxu0 0.0
    %367 = vmatpush1.msra.mxu0 0.0
    %368 = vmatprep.subr.mxu0 0.0
    %369 = vmatpush1.msra.mxu0 0.0
    %370 = vmatprep.subr.mxu0 0.0
    %371 = vmatpush1.msra.mxu0 0.0
    %372 = vmatprep.subr.mxu0 0.0
    %373 = vmatpush1.msra.mxu0 0.0
    %374 = vmatprep.subr.mxu0 0.0
    %375 = vmatpush1.msra.mxu0 0.0
    %376 = vmatprep.mubr.f32.mxu0 0.0
    %377 = vmatmul.mubr.f32.gmra.mrb[0].mxu0 %v241
    %v378 = vpop.f32.mrb[0].mxu0
    %v379 = vadd.f32 0.0, %v378
    %v380 = vpop.f32.mrb[0].mxu0
    %381 = vdwg.mxu0
    %382 = vst [vmem:[#allocation8] sm:$0xff] %v240
    %383 = vst [vmem:[#allocation8 + $0x8] sm:$0xff] %v241
    %384 = vst [vmem:[#allocation7] sm:$0xff] %v43
    %385 = vst [vmem:[#allocation7 + $0x10] sm:$0xff] %v44
    %386 = vst [vmem:[#allocation7 + $0x8] sm:$0xff] %v309
    %387 = vst [vmem:[#allocation7 + $0x18] sm:$0xff] %v379
    // Predicated region
    $region18: #{tpu_custom_call.1} parent=1 // pred_check
      _
    $region19: #{tpu_custom_call.1} parent=1 // pred_check_branch
      %389 = sbr.rel (0) target = $region21
    $region20: #{tpu_custom_call.1} parent=1 // pred_region
      %s391 = ssub.s32 512, 512
      %392 = vsyncadd [#allocation4], %s391
      %s393 = sshll.u32 [#allocation7], 4
      %s394 = int_to_ptr.vmem [resolvable:$true] %s393
      %399 = dma.vmem_to_hbm [thread:$0]  %s394, 512, %s2, [#allocation4], 256, 256, 16
    $region21: #{tpu_custom_call.1} parent=1 // pred_fallthru
      _
    // Predicated region
    $region22: #{tpu_custom_call.1} parent=1 // pred_check
      _
    $region23: #{tpu_custom_call.1} parent=1 // pred_check_branch
      %401 = sbr.rel (0) target = $region25
    $region24: #{tpu_custom_call.1} parent=1 // pred_region
      %s403 = ssub.s32 256, 256
      %404 = vsyncadd [#allocation9], %s403
      %s405 = sshll.u32 [#allocation8], 4
      %s406 = int_to_ptr.vmem [resolvable:$true] %s405
      %411 = dma.vmem_to_hbm [thread:$0]  %s406, 256, %s3, [#allocation9], 128, 128, 8
    $region25: #{tpu_custom_call.1} parent=1 // pred_fallthru
      _
    // Predicated region
    $region26: #{tpu_custom_call.1} parent=1 // pred_check
      _
    $region27: #{tpu_custom_call.1} parent=1 // pred_check_branch
      %413 = sbr.rel (0) target = $region29
    $region28: #{tpu_custom_call.1} parent=1 // pred_region
      %414 = dma.done [#allocation4], 512
    $region29: #{tpu_custom_call.1} parent=1 // pred_fallthru
      _
    // Predicated region
    $region30: #{tpu_custom_call.1} parent=1 // pred_check
      _
    $region31: #{tpu_custom_call.1} parent=1 // pred_check_branch
      %416 = sbr.rel (0) target = $region33
    $region32: #{tpu_custom_call.1} parent=1 // pred_region
      %417 = dma.done [#allocation9], 256
    $region33: #{tpu_custom_call.1} parent=1 // pred_fallthru
      _
    %418 = vsyncpa [#allocation3], 1
    %419 = vsyncpa [#allocation6], 1
    %420 = vsyncpa [#allocation4], 1
    %421 = vsyncpa [#allocation9], 1

</llo_original>
